<compile_context>
chip_gen: v7x
topology: tpu7x:2x2x1
jax: 0.10.0
libtpu: 0.0.40
codegen_flags: <defaults>
</compile_context>

<pallas_src>
import functools

import numpy as np
import jax
import jax.numpy as jnp
from jax.experimental import pallas as pl
from jax.experimental.pallas import tpu as pltpu


def _round_up(n, m):
    return ((n + m - 1) // m) * m


def _vmem_capacity_bytes():
    """Physical VMEM per TensorCore; conservative (v7x = 64 MiB) fallback."""
    try:
        cap = getattr(pltpu.get_tpu_info(), "vmem_capacity_bytes", None)
        if cap:
            return int(cap)
    except Exception:
        pass
    return 64 * 1024 * 1024


def _attention2_kernel(x_ref, wbd_ref, avg_ref, b_ref, o_ref, *, do_mean):
    """One row tile of the lane-packed problem.

    x_ref:   (eff, W)  features, W = pack * hidden lanes (lane-dense)
    wbd_ref: (W, W)    block-diagonal W^T (pack copies), bf16
    avg_ref: (W, W)    block-diagonal ones(H,H)/H, bf16 (group mean / group mask)
    b_ref:   (1, W)    bias tiled `pack` times, f32
    """
    x = x_ref[...]                       # native dtype; kept for the exact final scale
    xb = x.astype(jnp.bfloat16)          # MXU-native operand

    # Linear + ReLU: bf16 x bf16 -> f32 accumulate on the MXU.
    lin = jnp.dot(xb, wbd_ref[...], preferred_element_type=jnp.float32) + b_ref[...]
    w = jnp.maximum(lin, 0.0)

    # Per-timestep padding mask, already broadcast over that timestep's hidden
    # lanes: group-sum of |x| via the block-diagonal averaging matrix (MXU; no
    # XLU reduce, no sublane broadcast).
    gabs = jnp.dot(jnp.abs(xb), avg_ref[...], preferred_element_type=jnp.float32)
    # NB: -2**32 + 1 rounds to -2**32 in f32; harmless since masked rows have x == 0.
    w = jnp.where(gabs > 0.0, w, jnp.float32(-2.0 ** 32 + 1.0))

    if do_mean:
        # Per-timestep mean over hidden, broadcast back over its lanes, as a
        # second block-diagonal matmul (keeps everything lane-dense).
        s = jnp.dot(w.astype(jnp.bfloat16), avg_ref[...],
                    preferred_element_type=jnp.float32)
        out = s * x.astype(jnp.float32)
    else:
        out = w * x.astype(jnp.float32)

    o_ref[...] = out.astype(o_ref.dtype)


def attention2(features, weight, bias, *, mean=True, block_rows=None):
    """Attention2.forward.

    features: (B, T, H); weight: (H, H) torch nn.Linear layout (y = x @ W^T + b);
    bias: (H,).  block_rows (optional) caps packed rows per grid step.
    """
    B, T, H = features.shape
    rows = B * T
    itemsize = int(jnp.dtype(features.dtype).itemsize)

    # --- Lane-dense packing: put `pack` timesteps side by side so the last dim
    #     fills all 128 lanes (H=32 -> pack=4 -> width=128).
    pack = 128 // H if (H < 128 and 128 % H == 0) else 1
    width = pack * H

    rows_pk = _round_up(rows, pack)
    x2 = features.reshape(rows, H)
    if rows_pk != rows:
        x2 = jnp.pad(x2, ((0, rows_pk - rows), (0, 0)))
    rows_p = rows_pk // pack
    xp = x2.reshape(rows_p, width)

    # Block-diagonal bf16 MXU operands: `pack` copies of W^T / of ones(H,H)/H.
    wT = jnp.asarray(weight, jnp.float32).T                        # (H_in, H_out)
    eye = jnp.eye(pack, dtype=jnp.float32)
    wbd = jnp.kron(eye, wT).astype(jnp.bfloat16)                   # (width, width)
    avg = jnp.kron(eye, jnp.full((H, H), 1.0 / H, jnp.float32)).astype(jnp.bfloat16)
    b2 = jnp.tile(jnp.asarray(bias, jnp.float32), pack).reshape(1, width)
    # TODO(synk): for very large H (>= ~1536 f32) add a second grid axis tiling
    # the output columns of W^T instead of keeping the whole weight resident.

    # --- Row-tile sizing: big, VMEM-budgeted tiles (kernel is HBM-bound).
    vmem_cap = _vmem_capacity_bytes()
    vmem_limit = (vmem_cap * 3) // 4                 # ~48 MiB on v7x, ~96 MiB on v5e/v6e
    # Constant-index BlockSpecs still get two pipeline buffers -> count weights twice.
    weight_bytes = 2 * (2 * width * width * 2) + 2 * width * 4
    # Double-buffered in/out tiles + generous allowance for f32/bf16 body temporaries.
    per_row_bytes = 4 * width * itemsize + 6 * width * 4
    tile_budget = max(vmem_limit - weight_bytes - (2 << 20), 64 * per_row_bytes)
    cap = max(8, (tile_budget // per_row_bytes) // 8 * 8)

    rows_p8 = _round_up(rows_p, 8)
    eff = min(cap, rows_p8)
    if block_rows is not None:
        eff = min(eff, max(8, _round_up(int(block_rows), 8)))
    if rows_p8 >= 16:
        # Keep >= 2 grid steps so v7x's two TensorCores both get work.
        eff = min(eff, max(8, _round_up((rows_p8 + 1) // 2, 8)))
    eff = max(8, (eff // 8) * 8)

    padded_p = _round_up(rows_p, eff)                # no divisibility assert: pad tail
    if padded_p != rows_p:
        # zero packed rows hit the mask path inside the kernel and are sliced off below
        xp = jnp.pad(xp, ((0, padded_p - rows_p), (0, 0)))

    n_mm = 3 if mean else 2
    cost = pl.CostEstimate(
        flops=n_mm * 2 * padded_p * width * width + 8 * padded_p * width,
        transcendentals=0,
        bytes_accessed=2 * padded_p * width * itemsize + 2 * width * width * 2 + width * 4,
    )

    out = pl.pallas_call(
        functools.partial(_attention2_kernel, do_mean=bool(mean)),
        out_shape=jax.ShapeDtypeStruct((padded_p, width), features.dtype),
        grid_spec=pltpu.PrefetchScalarGridSpec(
            num_scalar_prefetch=0,
            grid=(padded_p // eff,),
            in_specs=[
                pl.BlockSpec((eff, width), lambda i: (i, 0)),     # features row tile
                pl.BlockSpec((width, width), lambda i: (0, 0)),   # block-diag W^T (resident)
                pl.BlockSpec((width, width), lambda i: (0, 0)),   # block-diag 1/H  (resident)
                pl.BlockSpec((1, width), lambda i: (0, 0)),       # bias (resident)
            ],
            out_specs=pl.BlockSpec((eff, width), lambda i: (i, 0)),
        ),
        compiler_params=pltpu.CompilerParams(
            dimension_semantics=("parallel",),
            vmem_limit_bytes=int(vmem_limit),
        ),
        cost_estimate=cost,
    )(xp, wbd, avg, b2)

    return out[:rows_p].reshape(rows_pk, H)[:rows].reshape(B, T, H)


if __name__ == "__main__":
    batch, time_step, hidden = 2, 8, 32
    key = jax.random.PRNGKey(0)
    k_x, k_w, k_b = jax.random.split(key, 3)

    features = jax.random.normal(k_x, (batch, time_step, hidden), dtype=jnp.float32)
    # Zero out some timesteps to exercise the padding-mask path.
    features = features.at[0, 6:, :].set(0.0)
    features = features.at[1, 7:, :].set(0.0)

    # Deterministic nn.Linear-style init (uniform in +-1/sqrt(H)).
    bound = 1.0 / float(np.sqrt(hidden))
    weight = jax.random.uniform(k_w, (hidden, hidden), minval=-bound, maxval=bound,
                                dtype=jnp.float32)
    bias = jax.random.uniform(k_b, (hidden,), minval=-bound, maxval=bound,
                              dtype=jnp.float32)

    out = attention2(features, weight, bias, mean=True)
    jax.block_until_ready(out)

    # Pure-numpy float64 reference of the PyTorch forward (mean=True path).
    f64 = np.asarray(features, np.float64)
    w64 = np.asarray(weight, np.float64)
    b64 = np.asarray(bias, np.float64)
    lin = np.maximum(f64 @ w64.T + b64, 0.0)
    nonzero = np.abs(f64).sum(-1, keepdims=True) > 0.0
    wm = np.where(nonzero, lin, -2.0 ** 32 + 1.0)
    s = wm.mean(-1, keepdims=True)
    ref = (s * f64).astype(np.float32)

    # Tolerance covers the bf16 MXU operands (f32 accumulate) vs the f64 reference.
    np.testing.assert_allclose(np.asarray(out), ref, rtol=2e-2, atol=2e-2)

    print("KERNEL_OK")
</pallas_src>

<mosaic_0001>
module attributes {stable_mosaic.version = 11 : i64} {
  func.func @_attention2_kernel(%arg0: i32, %arg1: memref<8x128xf32, #tpu.memory_space<vmem>>, %arg2: memref<128x128xbf16, #tpu.memory_space<vmem>>, %arg3: memref<128x128xbf16, #tpu.memory_space<vmem>>, %arg4: memref<1x128xf32, #tpu.memory_space<vmem>>, %arg5: memref<8x128xf32, #tpu.memory_space<vmem>>) attributes {dimension_semantics = [#tpu.dimension_semantics<parallel>], iteration_bounds = array<i64: 1>, scalar_prefetch = 0 : i64, scratch_operands = 0 : i64, tpu.core_type = #tpu.core_type<tc>, window_params = [{transform_indices = @transform_0, window_bounds = array<i64: 8, 128>}, {pipeline_mode = #tpu.pipeline_mode<synchronous>, transform_indices = @transform_1, window_bounds = array<i64: 128, 128>}, {pipeline_mode = #tpu.pipeline_mode<synchronous>, transform_indices = @transform_2, window_bounds = array<i64: 128, 128>}, {pipeline_mode = #tpu.pipeline_mode<synchronous>, transform_indices = @transform_3, window_bounds = array<i64: 1, 128>}, {transform_indices = @transform_4, window_bounds = array<i64: 8, 128>}]} {
    %c0 = arith.constant 0 : index
    %c0_0 = arith.constant 0 : index
    %0 = vector.load %arg1[%c0, %c0_0] : memref<8x128xf32, #tpu.memory_space<vmem>>, vector<8x128xf32>
    %1 = arith.truncf %0 : vector<8x128xf32> to vector<8x128xbf16>
    %c0_1 = arith.constant 0 : index
    %c0_2 = arith.constant 0 : index
    %2 = vector.load %arg2[%c0_1, %c0_2] : memref<128x128xbf16, #tpu.memory_space<vmem>>, vector<128x128xbf16>
    %cst = arith.constant dense<0.000000e+00> : vector<8x128xf32>
    %3 = tpu.matmul %1, %2, %cst {dimension_numbers = #tpu.dot_dimension_numbers<[1], [0], [0], [1], [0, 0, 1, 1], [], []>} : vector<8x128xbf16>, vector<128x128xbf16>, vector<8x128xf32> -> vector<8x128xf32>
    %c0_3 = arith.constant 0 : index
    %c0_4 = arith.constant 0 : index
    %4 = vector.load %arg4[%c0_3, %c0_4] : memref<1x128xf32, #tpu.memory_space<vmem>>, vector<1x128xf32>
    %5 = vector.broadcast %4 : vector<1x128xf32> to vector<8x128xf32>
    %6 = arith.addf %3, %5 : vector<8x128xf32>
    %cst_5 = arith.constant 0.000000e+00 : f32
    %7 = vector.broadcast %cst_5 : f32 to vector<8x128xf32>
    %8 = arith.maximumf %6, %7 : vector<8x128xf32>
    %9 = math.absf %1 : vector<8x128xbf16>
    %c0_6 = arith.constant 0 : index
    %c0_7 = arith.constant 0 : index
    %10 = vector.load %arg3[%c0_6, %c0_7] : memref<128x128xbf16, #tpu.memory_space<vmem>>, vector<128x128xbf16>
    %cst_8 = arith.constant dense<0.000000e+00> : vector<8x128xf32>
    %11 = tpu.matmul %9, %10, %cst_8 {dimension_numbers = #tpu.dot_dimension_numbers<[1], [0], [0], [1], [0, 0, 1, 1], [], []>} : vector<8x128xbf16>, vector<128x128xbf16>, vector<8x128xf32> -> vector<8x128xf32>
    %cst_9 = arith.constant 0.000000e+00 : f32
    %12 = vector.broadcast %cst_9 : f32 to vector<8x128xf32>
    %13 = arith.cmpf ogt, %11, %12 : vector<8x128xf32>
    %cst_10 = arith.constant -4.2949673E+9 : f32
    %14 = vector.broadcast %cst_10 : f32 to vector<8x128xf32>
    %15 = arith.select %13, %8, %14 : vector<8x128xi1>, vector<8x128xf32>
    %16 = arith.truncf %15 : vector<8x128xf32> to vector<8x128xbf16>
    %c0_11 = arith.constant 0 : index
    %c0_12 = arith.constant 0 : index
    %17 = vector.load %arg3[%c0_11, %c0_12] : memref<128x128xbf16, #tpu.memory_space<vmem>>, vector<128x128xbf16>
    %cst_13 = arith.constant dense<0.000000e+00> : vector<8x128xf32>
    %18 = tpu.matmul %16, %17, %cst_13 {dimension_numbers = #tpu.dot_dimension_numbers<[1], [0], [0], [1], [0, 0, 1, 1], [], []>} : vector<8x128xbf16>, vector<128x128xbf16>, vector<8x128xf32> -> vector<8x128xf32>
    %19 = arith.mulf %18, %0 : vector<8x128xf32>
    %c0_14 = arith.constant 0 : index
    %c0_15 = arith.constant 0 : index
    %20 = vector.load %arg5[%c0_14, %c0_15] : memref<8x128xf32, #tpu.memory_space<vmem>>, vector<8x128xf32>
    tpu.vector_store %arg5[%c0_14, %c0_15], %19 {strides = array<i32>} : memref<8x128xf32, #tpu.memory_space<vmem>>, vector<8x128xf32>,
    return
  }
  func.func @transform_0(%arg0: i32) -> (i32, i32) {
    %c0_i32 = arith.constant 0 : i32
    %c0_i32_0 = arith.constant 0 : i32
    return %arg0, %c0_i32 : i32, i32
  }
  func.func @transform_1(%arg0: i32) -> (i32, i32) {
    %c0_i32 = arith.constant 0 : i32
    %c0_i32_0 = arith.constant 0 : i32
    %c0_i32_1 = arith.constant 0 : i32
    return %c0_i32, %c0_i32_0 : i32, i32
  }
  func.func @transform_2(%arg0: i32) -> (i32, i32) {
    %c0_i32 = arith.constant 0 : i32
    %c0_i32_0 = arith.constant 0 : i32
    %c0_i32_1 = arith.constant 0 : i32
    return %c0_i32, %c0_i32_0 : i32, i32
  }
  func.func @transform_3(%arg0: i32) -> (i32, i32) {
    %c0_i32 = arith.constant 0 : i32
    %c0_i32_0 = arith.constant 0 : i32
    %c0_i32_1 = arith.constant 0 : i32
    return %c0_i32, %c0_i32_0 : i32, i32
  }
  func.func @transform_4(%arg0: i32) -> (i32, i32) {
    %c0_i32 = arith.constant 0 : i32
    %c0_i32_0 = arith.constant 0 : i32
    return %arg0, %c0_i32 : i32, i32
  }
}

</mosaic_0001>

<llo_original>
// kernel: tpu_custom_call.1
$region0: #{tpu_custom_call.1}
  #allocation0 [shape = 'u32[]', space=smem, size = 0x4, offset = 0x4, fixed_abs, tag = 'smem constant byte address 0x4 - core index']
  #allocation1 [shape = 'u32[144,128]{1,0:T(1,128)}', space=vmem, size = 0x12000, scoped, tag = 'internal scratch']
  %s0 = inlined_call_operand.hbm [shape: f32[8,128], index: 0, kind: input, shape index: {}]
  %s1 = inlined_call_operand.hbm [shape: bf16[128,128], index: 1, kind: input, shape index: {}]
  %s2 = inlined_call_operand.hbm [shape: bf16[128,128], index: 2, kind: input, shape index: {}]
  %s3 = inlined_call_operand.vmem [shape: f32[1,128], index: 3, kind: input, shape index: {}]
  %s4 = inlined_call_operand.hbm [shape: f32[8,128], index: 4, kind: output, shape index: {}]
  %s5 = sld [smem:[#allocation0]]
  $region38: #{tpu_custom_call.1} parent=0
    _
  %s7 = ssub.s32 1, %s5
  %s8 = scalar_select 0, %s7, %s5
  $region1: #{tpu_custom_call.1} parent=0
    #allocation2 [shape = 'u8[4096]{0}', space=vmem, size = 0x1000, scoped, tag = 'input window, operand 0, single buffered']
    #allocation3 [shape = 's32[1]{0}', space=sflag, size = 0x4, scoped, tag = 'scoped memory for tpu_custom_call.1']
    #allocation4 [shape = 's32[1]{0}', space=sflag, size = 0x4, scoped, tag = 'scoped memory for tpu_custom_call.1']
    #allocation5 [shape = 'u8[32768]{0}', space=vmem, size = 0x8000, scoped, tag = 'input window, operand 1, single buffered']
    #allocation6 [shape = 's32[1]{0}', space=sflag, size = 0x4, scoped, tag = 'scoped memory for tpu_custom_call.1']
    #allocation7 [shape = 'u8[32768]{0}', space=vmem, size = 0x8000, scoped, tag = 'input window, operand 2, single buffered']
    #allocation8 [shape = 'u8[4096]{0}', space=vmem, size = 0x1000, scoped, tag = 'output window, operand 0, single buffered']
    %9 = vsyncpa [#allocation3], 0
    %10 = vsyncpa [#allocation6], 0
    %11 = vsyncpa [#allocation4], 0
    // Predicated region
    $region2: #{tpu_custom_call.1} parent=1 // pred_check
      _
    $region3: #{tpu_custom_call.1} parent=1 // pred_check_branch
      %13 = sbr.rel (0) target = $region5
    $region4: #{tpu_custom_call.1} parent=1 // pred_region
      %s15 = ssub.s32 128, 128
      %16 = vsyncadd [#allocation3], %s15
      %s18 = sshll.u32 [#allocation2], 4
      %s19 = int_to_ptr.vmem [resolvable:$true] %s18
      %21 = dma.hbm_to_vmem [thread:$0]  %s0, 128, %s19, [#allocation3]
    $region5: #{tpu_custom_call.1} parent=1 // pred_fallthru
      _
    // Predicated region
    $region6: #{tpu_custom_call.1} parent=1 // pred_check
      _
    $region7: #{tpu_custom_call.1} parent=1 // pred_check_branch
      %23 = sbr.rel (0) target = $region9
    $region8: #{tpu_custom_call.1} parent=1 // pred_region
      %s25 = ssub.s32 1024, 1024
      %26 = vsyncadd [#allocation6], %s25
      %s27 = sshll.u32 [#allocation5], 4
      %s28 = int_to_ptr.vmem [resolvable:$true] %s27
      %33 = dma.hbm_to_vmem [thread:$0]  %s1, 1024, %s28, [#allocation6], 64, 64, 4
    $region9: #{tpu_custom_call.1} parent=1 // pred_fallthru
      _
    // Predicated region
    $region10: #{tpu_custom_call.1} parent=1 // pred_check
      _
    $region11: #{tpu_custom_call.1} parent=1 // pred_check_branch
      %35 = sbr.rel (0) target = $region13
    $region12: #{tpu_custom_call.1} parent=1 // pred_region
      %s37 = ssub.s32 1024, 1024
      %38 = vsyncadd [#allocation6], %s37
      %s39 = sshll.u32 [#allocation7], 4
      %s40 = int_to_ptr.vmem [resolvable:$true] %s39
      %45 = dma.hbm_to_vmem [thread:$0]  %s2, 1024, %s40, [#allocation6], 64, 64, 4
    $region13: #{tpu_custom_call.1} parent=1 // pred_fallthru
      _
    // Predicated region
    $region14: #{tpu_custom_call.1} parent=1 // pred_check
      _
    $region15: #{tpu_custom_call.1} parent=1 // pred_check_branch
      %47 = sbr.rel (0) target = $region17
    $region16: #{tpu_custom_call.1} parent=1 // pred_region
      _
    $region17: #{tpu_custom_call.1} parent=1 // pred_fallthru
      _
    // Predicated region
    $region18: #{tpu_custom_call.1} parent=1 // pred_check
      _
    $region19: #{tpu_custom_call.1} parent=1 // pred_check_branch
      %49 = sbr.rel (0) target = $region21
    $region20: #{tpu_custom_call.1} parent=1 // pred_region
      %50 = dma.done [#allocation3], 128
    $region21: #{tpu_custom_call.1} parent=1 // pred_fallthru
      _
    // Predicated region
    $region22: #{tpu_custom_call.1} parent=1 // pred_check
      _
    $region23: #{tpu_custom_call.1} parent=1 // pred_check_branch
      %52 = sbr.rel (0) target = $region25
    $region24: #{tpu_custom_call.1} parent=1 // pred_region
      %53 = dma.done [#allocation6], 1024
    $region25: #{tpu_custom_call.1} parent=1 // pred_fallthru
      _
    // Predicated region
    $region26: #{tpu_custom_call.1} parent=1 // pred_check
      _
    $region27: #{tpu_custom_call.1} parent=1 // pred_check_branch
      %55 = sbr.rel (0) target = $region29
    $region28: #{tpu_custom_call.1} parent=1 // pred_region
      %56 = dma.done [#allocation6], 1024
    $region29: #{tpu_custom_call.1} parent=1 // pred_fallthru
      _
    %v58 = vld [vmem:[#allocation2] sm:$0xff]
    %v59 = vpack.c.bf16 %v58, %v58
    %v60 = vld [vmem:[#allocation5] sm:$0xf]
    %v61 = vld [vmem:[#allocation5 + $0x4] sm:$0xf]
    %v62 = vld [vmem:[#allocation5 + $0x8] sm:$0xf]
    %v63 = vld [vmem:[#allocation5 + $0xc] sm:$0xf]
    %v64 = vld [vmem:[#allocation5 + $0x10] sm:$0xf]
    %v65 = vld [vmem:[#allocation5 + $0x14] sm:$0xf]
    %v66 = vld [vmem:[#allocation5 + $0x18] sm:$0xf]
    %v67 = vld [vmem:[#allocation5 + $0x1c] sm:$0xf]
    %v68 = vld [vmem:[#allocation5 + $0x20] sm:$0xf]
    %v69 = vld [vmem:[#allocation5 + $0x24] sm:$0xf]
    %v70 = vld [vmem:[#allocation5 + $0x28] sm:$0xf]
    %v71 = vld [vmem:[#allocation5 + $0x2c] sm:$0xf]
    %v72 = vld [vmem:[#allocation5 + $0x30] sm:$0xf]
    %v73 = vld [vmem:[#allocation5 + $0x34] sm:$0xf]
    %v74 = vld [vmem:[#allocation5 + $0x38] sm:$0xf]
    %v75 = vld [vmem:[#allocation5 + $0x3c] sm:$0xf]
    %v76 = vld [vmem:[%s3] sm:$0x1]
    %v78 = vlaneseq
    %v79 = vshrl.u32 %v78, 7
    %v80 = vsub.s32 0, %v79
    %v81 = vrot.slane %v76, %v80
    %v99 = vunpack.c.l.b16 %v60
    %v100 = vunpack.c.l.b16 %v61
    %v101 = vunpack.c.l.b16 %v62
    %v102 = vunpack.c.l.b16 %v63
    %v103 = vunpack.c.l.b16 %v64
    %v104 = vunpack.c.l.b16 %v65
    %v105 = vunpack.c.l.b16 %v66
    %v106 = vunpack.c.l.b16 %v67
    %v107 = vunpack.c.l.b16 %v68
    %v108 = vunpack.c.l.b16 %v69
    %v109 = vunpack.c.l.b16 %v70
    %v110 = vunpack.c.l.b16 %v71
    %v111 = vunpack.c.l.b16 %v72
    %v112 = vunpack.c.l.b16 %v73
    %v113 = vunpack.c.l.b16 %v74
    %v114 = vunpack.c.l.b16 %v75
    %v115 = vpack.c.b16 %v100, %v99
    %v116 = vpack.c.b16 %v102, %v101
    %v117 = vpack.c.b16 %v104, %v103
    %v118 = vpack.c.b16 %v106, %v105
    %v119 = vpack.c.b16 %v108, %v107
    %v120 = vpack.c.b16 %v110, %v109
    %v121 = vpack.c.b16 %v112, %v111
    %v122 = vpack.c.b16 %v114, %v113
    %131 = vmatprep.subr.bf16.mxu0 0
    %132 = vmatpush1.bf16.msra.mxu0 %v115
    %133 = vmatprep.subr.bf16.mxu0 0
    %134 = vmatpush1.bf16.msra.mxu0 %v116
    %135 = vmatprep.subr.bf16.mxu0 0
    %136 = vmatpush1.bf16.msra.mxu0 %v117
    %137 = vmatprep.subr.bf16.mxu0 0
    %138 = vmatpush1.bf16.msra.mxu0 %v118
    %139 = vmatprep.subr.bf16.mxu0 0
    %140 = vmatpush1.bf16.msra.mxu0 %v119
    %141 = vmatprep.subr.bf16.mxu0 0
    %142 = vmatpush1.bf16.msra.mxu0 %v120
    %143 = vmatprep.subr.bf16.mxu0 0
    %144 = vmatpush1.bf16.msra.mxu0 %v121
    %145 = vmatprep.subr.bf16.mxu0 0
    %146 = vmatpush1.bf16.msra.mxu0 %v122
    %147 = vmatprep.subr.bf16.mxu0 0
    %148 = vmatpush1.bf16.msra.mxu0 0
    %149 = vmatprep.subr.bf16.mxu0 0
    %150 = vmatpush1.bf16.msra.mxu0 0
    %151 = vmatprep.subr.bf16.mxu0 0
    %152 = vmatpush1.bf16.msra.mxu0 0
    %153 = vmatprep.subr.bf16.mxu0 0
    %154 = vmatpush1.bf16.msra.mxu0 0
    %155 = vmatprep.subr.bf16.mxu0 0
    %156 = vmatpush1.bf16.msra.mxu0 0
    %157 = vmatprep.subr.bf16.mxu0 0
    %158 = vmatpush1.bf16.msra.mxu0 0
    %159 = vmatprep.subr.bf16.mxu0 0
    %160 = vmatpush1.bf16.msra.mxu0 0
    %161 = vmatprep.subr.bf16.mxu0 0
    %162 = vmatpush1.bf16.msra.mxu0 0
    %163 = vmatprep.mubr.bf16.mxu0 0
    %164 = vmatmul.mubr.bf16.gmra.mrb[0].mxu0 %v59
    %v165 = vpop.f32.mrb[0].mxu0
    %v166 = vadd.f32 %v81, %v165
    %v167 = vpop.f32.mrb[0].mxu0
    %v168 = vpop.f32.mrb[0].mxu0
    %v169 = vpop.f32.mrb[0].mxu0
    %170 = vdwg.mxu0
    %v171 = vmax.f32 %v166, 0.0
    %v172 = vand.u32 2147450879, %v59
    %v173 = vld [vmem:[#allocation7] sm:$0xf]
    %v174 = vld [vmem:[#allocation7 + $0x4] sm:$0xf]
    %v175 = vld [vmem:[#allocation7 + $0x8] sm:$0xf]
    %v176 = vld [vmem:[#allocation7 + $0xc] sm:$0xf]
    %v177 = vld [vmem:[#allocation7 + $0x10] sm:$0xf]
    %v178 = vld [vmem:[#allocation7 + $0x14] sm:$0xf]
    %v179 = vld [vmem:[#allocation7 + $0x18] sm:$0xf]
    %v180 = vld [vmem:[#allocation7 + $0x1c] sm:$0xf]
    %v181 = vld [vmem:[#allocation7 + $0x20] sm:$0xf]
    %v182 = vld [vmem:[#allocation7 + $0x24] sm:$0xf]
    %v183 = vld [vmem:[#allocation7 + $0x28] sm:$0xf]
    %v184 = vld [vmem:[#allocation7 + $0x2c] sm:$0xf]
    %v185 = vld [vmem:[#allocation7 + $0x30] sm:$0xf]
    %v186 = vld [vmem:[#allocation7 + $0x34] sm:$0xf]
    %v187 = vld [vmem:[#allocation7 + $0x38] sm:$0xf]
    %v188 = vld [vmem:[#allocation7 + $0x3c] sm:$0xf]
    %v205 = vunpack.c.l.b16 %v173
    %v206 = vunpack.c.l.b16 %v174
    %v207 = vunpack.c.l.b16 %v175
    %v208 = vunpack.c.l.b16 %v176
    %v209 = vunpack.c.l.b16 %v177
    %v210 = vunpack.c.l.b16 %v178
    %v211 = vunpack.c.l.b16 %v179
    %v212 = vunpack.c.l.b16 %v180
    %v213 = vunpack.c.l.b16 %v181
    %v214 = vunpack.c.l.b16 %v182
    %v215 = vunpack.c.l.b16 %v183
    %v216 = vunpack.c.l.b16 %v184
    %v217 = vunpack.c.l.b16 %v185
    %v218 = vunpack.c.l.b16 %v186
    %v219 = vunpack.c.l.b16 %v187
    %v220 = vunpack.c.l.b16 %v188
    %v221 = vpack.c.b16 %v206, %v205
    %v222 = vpack.c.b16 %v208, %v207
    %v223 = vpack.c.b16 %v210, %v209
    %v224 = vpack.c.b16 %v212, %v211
    %v225 = vpack.c.b16 %v214, %v213
    %v226 = vpack.c.b16 %v216, %v215
    %v227 = vpack.c.b16 %v218, %v217
    %v228 = vpack.c.b16 %v220, %v219
    %237 = vmatprep.subr.bf16.mxu0 0
    %238 = vmatpush1.bf16.msra.mxu0 %v221
    %239 = vmatprep.subr.bf16.mxu0 0
    %240 = vmatpush1.bf16.msra.mxu0 %v222
    %241 = vmatprep.subr.bf16.mxu0 0
    %242 = vmatpush1.bf16.msra.mxu0 %v223
    %243 = vmatprep.subr.bf16.mxu0 0
    %244 = vmatpush1.bf16.msra.mxu0 %v224
    %245 = vmatprep.subr.bf16.mxu0 0
    %246 = vmatpush1.bf16.msra.mxu0 %v225
    %247 = vmatprep.subr.bf16.mxu0 0
    %248 = vmatpush1.bf16.msra.mxu0 %v226
    %249 = vmatprep.subr.bf16.mxu0 0
    %250 = vmatpush1.bf16.msra.mxu0 %v227
    %251 = vmatprep.subr.bf16.mxu0 0
    %252 = vmatpush1.bf16.msra.mxu0 %v228
    %253 = vmatprep.subr.bf16.mxu0 0
    %254 = vmatpush1.bf16.msra.mxu0 0
    %255 = vmatprep.subr.bf16.mxu0 0
    %256 = vmatpush1.bf16.msra.mxu0 0
    %257 = vmatprep.subr.bf16.mxu0 0
    %258 = vmatpush1.bf16.msra.mxu0 0
    %259 = vmatprep.subr.bf16.mxu0 0
    %260 = vmatpush1.bf16.msra.mxu0 0
    %261 = vmatprep.subr.bf16.mxu0 0
    %262 = vmatpush1.bf16.msra.mxu0 0
    %263 = vmatprep.subr.bf16.mxu0 0
    %264 = vmatpush1.bf16.msra.mxu0 0
    %265 = vmatprep.subr.bf16.mxu0 0
    %266 = vmatpush1.bf16.msra.mxu0 0
    %267 = vmatprep.subr.bf16.mxu0 0
    %268 = vmatpush1.bf16.msra.mxu0 0
    %269 = vmatprep.mubr.bf16.mxu0 0
    %270 = vmatmul.mubr.bf16.gmra.mrb[0].mxu0 %v172
    %v271 = vpop.f32.mrb[0].mxu0
    %v272 = vadd.f32 0.0, %v271
    %v273 = vpop.f32.mrb[0].mxu0
    %v274 = vpop.f32.mrb[0].mxu0
    %v275 = vpop.f32.mrb[0].mxu0
    %276 = vdwg.mxu0
    %vm277 = vcmp.gt.f32.partialorder %v272, 0.0
    %v278 = vsel %vm277, %v171, -4.2949673e+09
    %v279 = vpack.c.bf16 %v278, %v278
    %280 = vmatprep.subr.bf16.mxu0 0
    %281 = vmatpush1.bf16.msra.mxu0 %v221
    %282 = vmatprep.subr.bf16.mxu0 0
    %283 = vmatpush1.bf16.msra.mxu0 %v222
    %284 = vmatprep.subr.bf16.mxu0 0
    %285 = vmatpush1.bf16.msra.mxu0 %v223
    %286 = vmatprep.subr.bf16.mxu0 0
    %287 = vmatpush1.bf16.msra.mxu0 %v224
    %288 = vmatprep.subr.bf16.mxu0 0
    %289 = vmatpush1.bf16.msra.mxu0 %v225
    %290 = vmatprep.subr.bf16.mxu0 0
    %291 = vmatpush1.bf16.msra.mxu0 %v226
    %292 = vmatprep.subr.bf16.mxu0 0
    %293 = vmatpush1.bf16.msra.mxu0 %v227
    %294 = vmatprep.subr.bf16.mxu0 0
    %295 = vmatpush1.bf16.msra.mxu0 %v228
    %296 = vmatprep.subr.bf16.mxu0 0
    %297 = vmatpush1.bf16.msra.mxu0 0
    %298 = vmatprep.subr.bf16.mxu0 0
    %299 = vmatpush1.bf16.msra.mxu0 0
    %300 = vmatprep.subr.bf16.mxu0 0
    %301 = vmatpush1.bf16.msra.mxu0 0
    %302 = vmatprep.subr.bf16.mxu0 0
    %303 = vmatpush1.bf16.msra.mxu0 0
    %304 = vmatprep.subr.bf16.mxu0 0
    %305 = vmatpush1.bf16.msra.mxu0 0
    %306 = vmatprep.subr.bf16.mxu0 0
    %307 = vmatpush1.bf16.msra.mxu0 0
    %308 = vmatprep.subr.bf16.mxu0 0
    %309 = vmatpush1.bf16.msra.mxu0 0
    %310 = vmatprep.subr.bf16.mxu0 0
    %311 = vmatpush1.bf16.msra.mxu0 0
    %312 = vmatprep.mubr.bf16.mxu0 0
    %313 = vmatmul.mubr.bf16.gmra.mrb[0].mxu0 %v279
    %v314 = vpop.f32.mrb[0].mxu0
    %v315 = vadd.f32 0.0, %v314
    %v316 = vpop.f32.mrb[0].mxu0
    %v317 = vpop.f32.mrb[0].mxu0
    %v318 = vpop.f32.mrb[0].mxu0
    %319 = vdwg.mxu0
    %v320 = vmul.f32 %v315, %v58
    %321 = vst [vmem:[#allocation8] sm:$0xff] %v320
    // Predicated region
    $region30: #{tpu_custom_call.1} parent=1 // pred_check
      _
    $region31: #{tpu_custom_call.1} parent=1 // pred_check_branch
      %323 = sbr.rel (0) target = $region33
    $region32: #{tpu_custom_call.1} parent=1 // pred_region
      %s325 = ssub.s32 128, 128
      %326 = vsyncadd [#allocation4], %s325
      %s328 = sshll.u32 [#allocation8], 4
      %s329 = int_to_ptr.vmem [resolvable:$true] %s328
      %331 = dma.vmem_to_hbm [thread:$0]  %s329, 128, %s4, [#allocation4]
    $region33: #{tpu_custom_call.1} parent=1 // pred_fallthru
      _
    // Predicated region
    $region34: #{tpu_custom_call.1} parent=1 // pred_check
      _
    $region35: #{tpu_custom_call.1} parent=1 // pred_check_branch
      %333 = sbr.rel (0) target = $region37
    $region36: #{tpu_custom_call.1} parent=1 // pred_region
      %334 = dma.done [#allocation4], 128
    $region37: #{tpu_custom_call.1} parent=1 // pred_fallthru
      _
    %335 = vsyncpa [#allocation3], 1
    %336 = vsyncpa [#allocation6], 1
    %337 = vsyncpa [#allocation4], 1

</llo_original>
